<compile_context>
chip_gen: v6e
topology: v6e:2x2x1
jax: 0.10.0
libtpu: 0.0.40
codegen_flags: <defaults>
</compile_context>

<pallas_src>
import jax
import jax.numpy as jnp
from jax.experimental import pallas as pl
from jax.experimental.pallas import tpu as pltpu


_VMEM_LIMIT_BYTES = 32 * 1024 * 1024      # safe request on v5e/v6e/v7x
_SLAB_BUDGET_BYTES = 24 * 1024 * 1024     # in + out, double-buffered


# --------------------------------------------------------------------------
# Standalone Transpose(1, 2):  (B, N, C) -> (B, C, N)
# --------------------------------------------------------------------------

def _transpose_kernel(x_ref, o_ref):
    # x_ref: (tn, tc) tile of the current batch element
    # o_ref: (tc, tn) tile of the transposed output
    o_ref[...] = x_ref[...].T


def transpose_1_2(
    x: jax.Array,
    *,
    tile_n: int = 512,
    tile_c: int = 512,
    vmem_slab_budget: int = _SLAB_BUDGET_BYTES,
) -> jax.Array:
    """Pallas equivalent of torch.Tensor.transpose(1, 2) on a 3-D tensor."""
    B, N, C = x.shape
    itemsize = jnp.dtype(x.dtype).itemsize
    cost = pl.CostEstimate(
        flops=0, transcendentals=0, bytes_accessed=2 * B * N * C * itemsize
    )

    # in + out, double-buffered, one full (N, C) slab.
    slab_bytes = 4 * N * C * itemsize

    if slab_bytes <= vmem_slab_budget:
        # One grid step per batch element: fewest Pallas steps, full-dim
        # blocks (the "block == full dim" exception to the (8,128) rule).
        grid = (B,)
        in_specs = [pl.BlockSpec((pl.Squeezed(), N, C), lambda b: (b, 0, 0))]
        out_specs = pl.BlockSpec((pl.Squeezed(), C, N), lambda b: (b, 0, 0))
        semantics = ("parallel",)
    else:
        # Tiled fallback for large inputs; 512x512 fp32 tiles = 4 MiB
        # double-buffered, safe under every generation's default limit.
        tn = N if N <= tile_n else tile_n
        tc = C if C <= tile_c else tile_c
        assert tn == N or tn % 128 == 0, "tile_n must be a multiple of 128"
        assert tc == C or tc % 128 == 0, "tile_c must be a multiple of 128"
        grid = (B, pl.cdiv(N, tn), pl.cdiv(C, tc))
        in_specs = [
            pl.BlockSpec((pl.Squeezed(), tn, tc), lambda b, i, j: (b, i, j))
        ]
        out_specs = pl.BlockSpec(
            (pl.Squeezed(), tc, tn), lambda b, i, j: (b, j, i)
        )
        semantics = ("parallel", "parallel", "parallel")

    return pl.pallas_call(
        _transpose_kernel,
        out_shape=jax.ShapeDtypeStruct((B, C, N), x.dtype),
        grid_spec=pl.GridSpec(grid=grid, in_specs=in_specs, out_specs=out_specs),
        compiler_params=pltpu.CompilerParams(
            dimension_semantics=semantics,
            vmem_limit_bytes=_VMEM_LIMIT_BYTES,
        ),
        cost_estimate=cost,
    )(x)


class Transpose:
    """Mirror of the PyTorch nn.Module. Dims (1, 2)/(2, 1) on a 3-D tensor hit
    the Pallas hot path (the DPT use-case); other dim pairs fall back to
    jnp.swapaxes glue."""

    def __init__(self, dim0: int, dim1: int):
        self.dim0 = dim0
        self.dim1 = dim1

    def __call__(self, x: jax.Array) -> jax.Array:
        d0, d1 = self.dim0 % x.ndim, self.dim1 % x.ndim
        if x.ndim == 3 and {d0, d1} == {1, 2}:
            return transpose_1_2(x)
        return jnp.swapaxes(x, d0, d1)


# --------------------------------------------------------------------------
# Fused Transpose(1,2) + Unflatten + Conv2d(kernel_size=1):
#   tokens (B, N, Cvit), weight (Cout, Cvit), bias (Cout,)  ->  (B, Cout, H, W)
# The axis swap is absorbed into the dot_general contraction dims, so the
# transposed (B, Cvit, N) tensor is never materialized in HBM.
# --------------------------------------------------------------------------

def _tokens_conv1x1_kernel(x_ref, w_ref, b_ref, o_ref):
    # x_ref: (tn, Cvit)   token tile of the current batch element
    # w_ref: (tco, Cvit)  1x1-conv weight tile
    # b_ref: (tco, 1)     bias tile
    # o_ref: (tco, tn)    output tile, already in (C_out, N) layout
    acc = jax.lax.dot_general(
        w_ref[...],
        x_ref[...],
        dimension_numbers=(((1,), (1,)), ((), ())),   # W @ X^T on the MXU
        preferred_element_type=jnp.float32,
    )
    o_ref[...] = (acc + b_ref[...]).astype(o_ref.dtype)


def tokens_to_feature_map(
    tokens: jax.Array,
    weight: jax.Array,
    bias: jax.Array,
    hw: tuple,
    *,
    tile_n: int = 512,
    tile_co: int = 1024,
) -> jax.Array:
    """Fused act_postprocess prefix: Transpose(1,2) + Unflatten + 1x1 conv."""
    B, N, Cvit = tokens.shape
    H, W = hw
    assert H * W == N, "token count must equal H*W"
    if weight.ndim == 4:                       # (Cout, Cvit, 1, 1) conv weight
        weight = weight.reshape(weight.shape[0], weight.shape[1])
    Cout = weight.shape[0]
    assert weight.shape[1] == Cvit
    bias2d = bias.reshape(Cout, 1)

    tn = N if N <= tile_n else tile_n
    tco = Cout if Cout <= tile_co else tile_co
    assert tn == N or tn % 128 == 0
    assert tco == Cout or tco % 128 == 0

    grid = (B, pl.cdiv(N, tn), pl.cdiv(Cout, tco))

    itemsize = jnp.dtype(tokens.dtype).itemsize
    cost = pl.CostEstimate(
        flops=2 * B * N * Cvit * Cout,
        transcendentals=0,
        bytes_accessed=(B * N * Cvit + Cout * Cvit + Cout + B * Cout * N)
        * itemsize,
    )

    out = pl.pallas_call(
        _tokens_conv1x1_kernel,
        out_shape=jax.ShapeDtypeStruct((B, Cout, N), tokens.dtype),
        grid_spec=pl.GridSpec(
            grid=grid,
            in_specs=[
                pl.BlockSpec((pl.Squeezed(), tn, Cvit), lambda b, i, j: (b, i, 0)),
                pl.BlockSpec((tco, Cvit), lambda b, i, j: (j, 0)),
                pl.BlockSpec((tco, 1), lambda b, i, j: (j, 0)),
            ],
            out_specs=pl.BlockSpec(
                (pl.Squeezed(), tco, tn), lambda b, i, j: (b, j, i)
            ),
        ),
        compiler_params=pltpu.CompilerParams(
            dimension_semantics=("parallel", "parallel", "parallel"),
            vmem_limit_bytes=_VMEM_LIMIT_BYTES,
        ),
        cost_estimate=cost,
    )(tokens, weight, bias2d)

    # (B, Cout, N) -> (B, Cout, H, W): pure metadata reshape, no copy.
    return out.reshape(B, Cout, H, W)


if __name__ == "__main__":
    key = jax.random.PRNGKey(0)
    k1, k2, k3, k4, k5 = jax.random.split(key, 5)

    # 1) DPT-style token tensor through the Transpose module (whole-slab path).
    B, N, C = 2, 16, 32
    x = jax.random.normal(k1, (B, N, C), dtype=jnp.float32)
    mod = Transpose(1, 2)
    y = jax.block_until_ready(mod(x))
    ref = jnp.swapaxes(x, 1, 2)
    assert y.shape == (B, C, N), y.shape
    assert y.dtype == x.dtype
    assert bool(jnp.all(y == ref))

    # 2) Force the tiled fallback (incl. masked tail tiles) with non-aligned
    #    dims and small tiles.
    x2 = jax.random.normal(k2, (1, 200, 260), dtype=jnp.float32)
    y2 = jax.block_until_ready(
        transpose_1_2(x2, tile_n=128, tile_c=128, vmem_slab_budget=0)
    )
    assert y2.shape == (1, 260, 200), y2.shape
    assert bool(jnp.all(y2 == jnp.swapaxes(x2, 1, 2)))

    # 3) Fused Transpose(1,2) + Unflatten + 1x1 Conv (the act_postprocess
    #    prefix) — the transposed tensor never touches HBM.
    Bf, H, Wp, Cvit, Cout = 2, 8, 8, 96, 48
    tokens = jax.random.normal(k3, (Bf, H * Wp, Cvit), dtype=jnp.float32)
    w = jax.random.normal(k4, (Cout, Cvit), dtype=jnp.float32) * 0.05
    bvec = jax.random.normal(k5, (Cout,), dtype=jnp.float32)
    fused = jax.block_until_ready(
        tokens_to_feature_map(tokens, w, bvec, (H, Wp))
    )
    ref3 = (
        jnp.einsum("bnc,oc->bon", tokens, w) + bvec[None, :, None]
    ).reshape(Bf, Cout, H, Wp)
    assert fused.shape == (Bf, Cout, H, Wp), fused.shape
    assert bool(jnp.allclose(fused, ref3, rtol=1e-5, atol=1e-5))

    print("KERNEL_OK")
</pallas_src>

<mosaic_0001>
module attributes {stable_mosaic.version = 11 : i64} {
  func.func @_transpose_kernel(%arg0: i32, %arg1: memref<1x16x32xf32, #tpu.memory_space<vmem>>, %arg2: memref<1x32x16xf32, #tpu.memory_space<vmem>>) attributes {dimension_semantics = [#tpu.dimension_semantics<parallel>], iteration_bounds = array<i64: 2>, scalar_prefetch = 0 : i64, scratch_operands = 0 : i64, tpu.core_type = #tpu.core_type<tc>, window_params = [{transform_indices = @transform_0, window_bounds = array<i64: 1, 16, 32>}, {transform_indices = @transform_1, window_bounds = array<i64: 1, 32, 16>}]} {
    %c0 = arith.constant 0 : index
    %c0_0 = arith.constant 0 : index
    %c0_1 = arith.constant 0 : index
    %0 = vector.load %arg1[%c0, %c0_0, %c0_1] : memref<1x16x32xf32, #tpu.memory_space<vmem>>, vector<1x16x32xf32>
    %1 = vector.shape_cast %0 : vector<1x16x32xf32> to vector<16x32xf32>
    %2 = tpu.transpose %1, [1, 0] : vector<16x32xf32> -> vector<32x16xf32>
    %c0_2 = arith.constant 0 : index
    %c0_3 = arith.constant 0 : index
    %c0_4 = arith.constant 0 : index
    %3 = vector.load %arg2[%c0_2, %c0_3, %c0_4] : memref<1x32x16xf32, #tpu.memory_space<vmem>>, vector<1x32x16xf32>
    %4 = vector.shape_cast %3 : vector<1x32x16xf32> to vector<32x16xf32>
    %5 = vector.shape_cast %2 : vector<32x16xf32> to vector<1x32x16xf32>
    tpu.vector_store %arg2[%c0_2, %c0_3, %c0_4], %5 {strides = array<i32>} : memref<1x32x16xf32, #tpu.memory_space<vmem>>, vector<1x32x16xf32>,
    return
  }
  func.func @transform_0(%arg0: i32) -> (i32, i32, i32) {
    %c0_i32 = arith.constant 0 : i32
    %c0_i32_0 = arith.constant 0 : i32
    %c0_i32_1 = arith.constant 0 : i32
    return %arg0, %c0_i32, %c0_i32_0 : i32, i32, i32
  }
  func.func @transform_1(%arg0: i32) -> (i32, i32, i32) {
    %c0_i32 = arith.constant 0 : i32
    %c0_i32_0 = arith.constant 0 : i32
    %c0_i32_1 = arith.constant 0 : i32
    return %arg0, %c0_i32, %c0_i32_0 : i32, i32, i32
  }
}

</mosaic_0001>

<llo_original>
// kernel: tpu_custom_call.1
$region0: #{tpu_custom_call.1}
  #allocation0 [shape = 'u32[]', space=smem, size = 0x4, offset = 0x4, fixed_abs, tag = 'smem constant byte address 0x4 - core index']
  #allocation1 [shape = 'u32[144,128]{1,0:T(1,128)}', space=vmem, size = 0x12000, scoped, tag = 'internal scratch']
  %s0 = inlined_call_operand.hbm [shape: f32[2,16,32], index: 0, kind: input, shape index: {}]
  %s1 = inlined_call_operand.vmem [shape: f32[2,32,16], index: 1, kind: output, shape index: {}]
  %s2 = sld [smem:[#allocation0]]
  $region41: #{tpu_custom_call.1} parent=0
    _
  %s4 = ssub.s32 1, %s2
  %s5 = scalar_select 0, %s4, %s2
  $region1: #{tpu_custom_call.1} parent=0
    #allocation2 [shape = 'u8[16384]{0}', space=vmem, size = 0x4000, scoped, tag = 'input window, operand 0']
    #allocation3 [shape = 's32[2]{0}', space=sflag, size = 0x8, scoped, tag = 'scoped memory for tpu_custom_call.1']
    %6 = vsyncpa [#allocation3], 0
    %s7 = scalar_lea.sflag [#allocation3], 1
    %8 = vsyncpa %s7, 0
    loop: start=0, step=1, limit=4
    $region2: #{tpu_custom_call.1} parent=1 // loop_pre_header
      _
    $region3: #{tpu_custom_call.1} parent=1 // loop_header
      %s10 = sphi 0, %s14
      %p11 = scmp.ge.s32.totalorder %s10, 4
      %s20 = sphi 0, %s22
      %s23 = sphi 0, %s20
      %s24 = sphi 0, %s23
      %s40 = sphi 0, %s24
      %s46 = sphi 0, %s48
      %s49 = sphi 0, %s46
      %s50 = sphi 0, %s49
      %s66 = sphi 0, %s50
    $region4: #{tpu_custom_call.1} parent=1 // loop_header_branch
      %13 = sbr.rel (%p11) target = $region8
    $region5: #{tpu_custom_call.1} parent=1 // loop_body
      %s15 = ssub.s32 %s10, 1
      %s16 = ssub.s32 %s10, 2
      %s17 = sadd.s32 %s10, 1
      %s18 = ssub.s32 %s10, %s17
      %p19 = scmp.eq.s32.totalorder %s18, 0
      %s21 = sadd.s32 %s20, 1
      %s22 = scalar_select %p19, %s20, %s21
      %p25 = pneg %p19
      %p26 = scmp.eq.s32.totalorder %s10, 1
      %p27 = por %p25, %p26
      %p28 = scmp.ne.s32.totalorder %s20, %s23
      %p29 = scmp.eq.s32.totalorder %s10, 0
      %p30 = por %p28, %p29
      %p31 = scmp.ne.s32.totalorder %s20, %s23
      %p32 = scmp.eq.s32.totalorder %s15, 1
      %p33 = por %p31, %p32
      %p34 = scmp.ne.s32.totalorder %s23, %s24
      %p35 = scmp.eq.s32.totalorder %s15, 0
      %p36 = por %p34, %p35
      %p37 = scmp.ne.s32.totalorder %s23, %s24
      %p38 = scmp.eq.s32.totalorder %s16, 1
      %p39 = por %p37, %p38
      %p41 = scmp.ne.s32.totalorder %s24, %s40
      %p42 = scmp.eq.s32.totalorder %s16, 0
      %p43 = por %p41, %p42
      %s44 = ssub.s32 %s10, %s17
      %p45 = scmp.eq.s32.totalorder %s44, 0
      %s47 = sadd.s32 %s46, 1
      %s48 = scalar_select %p45, %s46, %s47
      %p51 = pneg %p45
      %p52 = scmp.eq.s32.totalorder %s10, 1
      %p53 = por %p51, %p52
      %p54 = scmp.ne.s32.totalorder %s46, %s49
      %p55 = scmp.eq.s32.totalorder %s10, 0
      %p56 = por %p54, %p55
      %p57 = scmp.ne.s32.totalorder %s46, %s49
      %p58 = scmp.eq.s32.totalorder %s15, 1
      %p59 = por %p57, %p58
      %p60 = scmp.ne.s32.totalorder %s49, %s50
      %p61 = scmp.eq.s32.totalorder %s15, 0
      %p62 = por %p60, %p61
      %p63 = scmp.ne.s32.totalorder %s49, %s50
      %p64 = scmp.eq.s32.totalorder %s16, 1
      %p65 = por %p63, %p64
      %p67 = scmp.ne.s32.totalorder %s50, %s66
      %p68 = scmp.eq.s32.totalorder %s16, 0
      %p69 = por %p67, %p68
      %p70 = scmp.le.s32.totalorder 1, %s10
      %p71 = scmp.lt.s32.totalorder %s10, 3
      %p72 = pnand %p70, %p71
      %p73 = pneg %p72
      // Predicated region
      $region9: #{tpu_custom_call.1} parent=5 // pred_check
        _
      $region10: #{tpu_custom_call.1} parent=5 // pred_check_branch
        %75 = sbr.rel (%p72) target = $region12
      $region11: #{tpu_custom_call.1} parent=5 // pred_region
        %s76 = ssub.s32 %s10, 1
      $region12: #{tpu_custom_call.1} parent=5 // pred_fallthru
        _
      %p77 = scmp.lt.s32.totalorder %s10, 2
      // Predicated region
      $region13: #{tpu_custom_call.1} parent=5 // pred_check
        %p78 = pneg %p77
      $region14: #{tpu_custom_call.1} parent=5 // pred_check_branch
        %80 = sbr.rel (%p78) target = $region16
      $region15: #{tpu_custom_call.1} parent=5 // pred_region
        // Predicated region
        $region17: #{tpu_custom_call.1} parent=15 // pred_check
          %p81 = pneg %p30
        $region18: #{tpu_custom_call.1} parent=15 // pred_check_branch
          %83 = sbr.rel (%p81) target = $region20
        $region19: #{tpu_custom_call.1} parent=15 // pred_region
          %s84 = sand.u32 %s20, 1
          %s85 = scalar_lea.sflag [#allocation3], %s84
          %s86 = sand.u32 %s20, 1
          %s87 = smul.addr %s86, 16
          %s88 = scalar_lea.vmem [#allocation2], %s87
          %s90 = ssub.s32 256, 256
          %91 = vsyncadd %s85, %s90
          %s92 = smul.addr %s10, 2
          %s93 = smul.addr %s92, 128
          %s94 = scalar_lea.hbm %s0, %s93
          %s95 = sshll.u32 %s88, 4
          %s96 = int_to_ptr.vmem [resolvable:$true] %s95
          %101 = dma.hbm_to_vmem [thread:$0]  %s94, 256, %s96, %s85, 128, 128, 8
        $region20: #{tpu_custom_call.1} parent=15 // pred_fallthru
          _
      $region16: #{tpu_custom_call.1} parent=5 // pred_fallthru
        _
      %p102 = scmp.le.s32.totalorder 1, %s10
      %p103 = scmp.lt.s32.totalorder %s10, 3
      %p104 = pnand %p102, %p103
      %p105 = pneg %p104
      // Predicated region
      $region21: #{tpu_custom_call.1} parent=5 // pred_check
        _
      $region22: #{tpu_custom_call.1} parent=5 // pred_check_branch
        %107 = sbr.rel (%p104) target = $region24
      $region23: #{tpu_custom_call.1} parent=5 // pred_region
        %s108 = ssub.s32 %s10, 1
        %s109 = sand.u32 %s23, 1
        %s110 = scalar_lea.sflag [#allocation3], %s109
        %s111 = sand.u32 %s23, 1
        %s112 = smul.addr %s111, 16
        %s113 = scalar_lea.vmem [#allocation2], %s112
        // Predicated region
        $region25: #{tpu_custom_call.1} parent=23 // pred_check
          %p114 = pneg %p36
        $region26: #{tpu_custom_call.1} parent=23 // pred_check_branch
          %116 = sbr.rel (%p114) target = $region28
        $region27: #{tpu_custom_call.1} parent=23 // pred_region
          %117 = dma.done %s110, 256
        $region28: #{tpu_custom_call.1} parent=23 // pred_fallthru
          _
        %s118 = sand.u32 %s23, 1
        %s119 = scalar_lea.sflag [#allocation3], %s118
        %s120 = sand.u32 %s23, 1
        %s121 = smul.addr %s120, 16
        %s122 = scalar_lea.vmem [#allocation2], %s121
        %p123 = pneg %p36
        %p124 = pneg %p33
        %p125 = pneg %p62
        %p126 = pneg %p59
        %p127 = scmp.lt.s32.totalorder %s15, 1
        %s128 = scalar_select %p127, %s15, 1
        %s129 = smul.addr %s128, 4
        %s130 = smul.addr %s129, 8
        %s131 = scalar_lea.vmem %s1, %s130
        %p132 = scmp.lt.s32.totalorder %s15, 1
        %s133 = scalar_select %p132, %s15, 1
        %s134 = smul.addr %s133, 4
        %s135 = smul.addr %s134, 8
        %s136 = scalar_lea.vmem %s1, %s135
        %v137 = vld [vmem:[%s113] sm:$0xff]
        %v138 = vld [vmem:[%s113 + $0x8] sm:$0xff]
        %139 = vxpose.xlu0.b32.start [1/16] %v137, 128
        %140 = vxpose.xlu0.b32.cont [2/16] %v138, 128
        %141 = vxpose.xlu0.b32.cont [3/16] 0.0, 128
        %142 = vxpose.xlu0.b32.cont [4/16] 0.0, 128
        %143 = vxpose.xlu0.b32.cont [5/16] 0.0, 128
        %144 = vxpose.xlu0.b32.cont [6/16] 0.0, 128
        %145 = vxpose.xlu0.b32.cont [7/16] 0.0, 128
        %146 = vxpose.xlu0.b32.cont [8/16] 0.0, 128
        %147 = vxpose.xlu0.b32.cont [9/16] 0.0, 128
        %148 = vxpose.xlu0.b32.cont [10/16] 0.0, 128
        %149 = vxpose.xlu0.b32.cont [11/16] 0.0, 128
        %150 = vxpose.xlu0.b32.cont [12/16] 0.0, 128
        %151 = vxpose.xlu0.b32.cont [13/16] 0.0, 128
        %152 = vxpose.xlu0.b32.cont [14/16] 0.0, 128
        %153 = vxpose.xlu0.b32.cont [15/16] 0.0, 128
        %154 = vxpose.xlu0.b32.end [16/16] 0.0, 128
        %v155 = vpop.trf.xlu0
        %v156 = vpop.trf.xlu0
        %v157 = vpop.trf.xlu0
        %v158 = vpop.trf.xlu0
        %v159 = vpop.trf.xlu0
        %v160 = vpop.trf.xlu0
        %v161 = vpop.trf.xlu0
        %v162 = vpop.trf.xlu0
        %v163 = vpop.trf.xlu0
        %v164 = vpop.trf.xlu0
        %v165 = vpop.trf.xlu0
        %v166 = vpop.trf.xlu0
        %v167 = vpop.trf.xlu0
        %v168 = vpop.trf.xlu0
        %v169 = vpop.trf.xlu0
        %v170 = vpop.trf.xlu0
        %vm171 = vcmask 130048
        %172 = vst.msk [vmem:[%s136] sm:$0xff] %vm171, %v155
        %173 = vst.msk [vmem:[%s136 + $0x8] sm:$0xff] %vm171, %v156
        %174 = vst.msk [vmem:[%s136 + $0x10] sm:$0xff] %vm171, %v157
        %175 = vst.msk [vmem:[%s136 + $0x18] sm:$0xff] %vm171, %v158
        %p176 = scmp.lt.s32.totalorder %s15, 1
        %s177 = scalar_select %p176, %s15, 1
        %s178 = smul.addr %s177, 4
        %s179 = smul.addr %s178, 8
        %s180 = scalar_lea.vmem %s1, %s179
        // Predicated region
        $region29: #{tpu_custom_call.1} parent=23 // pred_check
          %p181 = pneg %p59
        $region30: #{tpu_custom_call.1} parent=23 // pred_check_branch
          %183 = sbr.rel (%p181) target = $region32
        $region31: #{tpu_custom_call.1} parent=23 // pred_region
          _
        $region32: #{tpu_custom_call.1} parent=23 // pred_fallthru
          _
      $region24: #{tpu_custom_call.1} parent=5 // pred_fallthru
        _
      %p184 = scmp.le.s32.totalorder 2, %s10
      // Predicated region
      $region33: #{tpu_custom_call.1} parent=5 // pred_check
        %p185 = pneg %p184
      $region34: #{tpu_custom_call.1} parent=5 // pred_check_branch
        %187 = sbr.rel (%p185) target = $region36
      $region35: #{tpu_custom_call.1} parent=5 // pred_region
        %s188 = ssub.s32 %s10, 2
        // Predicated region
        $region37: #{tpu_custom_call.1} parent=35 // pred_check
          %p189 = pneg %p65
        $region38: #{tpu_custom_call.1} parent=35 // pred_check_branch
          %191 = sbr.rel (%p189) target = $region40
        $region39: #{tpu_custom_call.1} parent=35 // pred_region
          %p192 = scmp.lt.s32.totalorder %s16, 1
          %s193 = scalar_select %p192, %s16, 1
          %s194 = smul.addr %s193, 4
          %s195 = smul.addr %s194, 8
          %s196 = scalar_lea.vmem %s1, %s195
        $region40: #{tpu_custom_call.1} parent=35 // pred_fallthru
          _
      $region36: #{tpu_custom_call.1} parent=5 // pred_fallthru
        _
    $region6: #{tpu_custom_call.1} parent=1 // loop_footer
      %s14 = sadd.s32 1, %s10
    $region7: #{tpu_custom_call.1} parent=1 // loop_footer_branch
      %9 = sbr.rel target = $region3
    $region8: #{tpu_custom_call.1} parent=1 // loop_exit
      _
    %197 = vsyncpa [#allocation3], 1
    %s198 = scalar_lea.sflag [#allocation3], 1
    %199 = vsyncpa %s198, 1

</llo_original>
